<compile_context>
chip_gen: v7x
topology: tpu7x:2x2x1
jax: 0.10.0
libtpu: 0.0.40
codegen_flags: <defaults>
</compile_context>

<pallas_src>
import jax
import jax.numpy as jnp
from jax import lax
from jax.experimental import pallas as pl
from jax.experimental.pallas import tpu as pltpu


# ------------------------------ kernels ------------------------------------


def _encode_x_kernel(x_ref, w1_ref, b1_ref, w2_ref, b2_ref, w3_ref, b3_ref, out_ref):
    """xi_encoder MLP on one [TX, 8] tile (input feature dim padded 7 -> 8)."""
    h = jnp.dot(x_ref[...], w1_ref[...], preferred_element_type=jnp.float32) + b1_ref[...]
    h = jnp.maximum(h, 0.0)
    h = jnp.dot(h, w2_ref[...], preferred_element_type=jnp.float32) + b2_ref[...]
    h = jnp.maximum(h, 0.0)
    out_ref[...] = (
        jnp.dot(h, w3_ref[...], preferred_element_type=jnp.float32) + b3_ref[...]
    )


def _encode_v_kernel(v_ref, w1_ref, b1_ref, w2_ref, b2_ref, w3_ref, b3_ref, out_ref):
    """v_encoder MLP on one [TV, 1] tile.

    Linear(1, 128) is a rank-1 outer product: do it on the VPU (broadcast mul-add)
    instead of wasting an MXU pass with K=1.
    """
    h = v_ref[...] * w1_ref[...] + b1_ref[...]          # [TV,1]*[1,128] -> [TV,128]
    h = jnp.maximum(h, 0.0)
    h = jnp.dot(h, w2_ref[...], preferred_element_type=jnp.float32) + b2_ref[...]
    h = jnp.maximum(h, 0.0)
    out_ref[...] = (
        jnp.dot(h, w3_ref[...], preferred_element_type=jnp.float32) + b3_ref[...]
    )


def _score_kernel(gx_ref, hv_ref, out_ref):
    """scores tile = g(x)[TX,8] contracted with h(v)[TV,8] on the shared dim (K=8)."""
    out_ref[...] = lax.dot_general(
        gx_ref[...],
        hv_ref[...],
        dimension_numbers=(((1,), (1,)), ((), ())),      # no explicit .T / XLU transpose
        preferred_element_type=jnp.float32,
    )


# ------------------------------ wrapper -------------------------------------


def _round_up(x, m):
    return ((x + m - 1) // m) * m


def marginal_separable_critic(x0i, v1, params, *, tx_max=256, tv_max=2048):
    """x0i: [Bx, 7] float32, v1: [Bv, 1] float32 -> scores [Bx, Bv] float32."""
    Bx, Bv = x0i.shape[0], v1.shape[0]

    # Tile sizes: sublane-aligned on the x axis, lane-dense (multiple of 128) on the v
    # axis so the score-tile stores are unmasked. Capped so double-buffered tiles stay
    # small even on v7x's 64 MiB VMEM.
    TX = min(tx_max, _round_up(Bx, 8))
    TV = min(tv_max, _round_up(Bv, 128))
    Bx_pad = _round_up(Bx, TX)
    Bv_pad = _round_up(Bv, TV)

    f32 = jnp.float32
    # Pad x features 7 -> 8 (and the matching weight with a zero row) so the first-layer
    # load is not sub-sublane; pad batch dims up to whole tiles (sliced off at the end).
    x_pad = jnp.zeros((Bx_pad, 8), f32).at[:Bx, :7].set(x0i.astype(f32))
    v_pad = jnp.zeros((Bv_pad, 1), f32).at[:Bv, :].set(v1.astype(f32))
    xw1_pad = jnp.zeros((8, 128), f32).at[:7, :].set(params["xw1"])

    full = lambda shape: pl.BlockSpec(shape, lambda *idx: (0,) * len(shape))

    # ---- 1) x-encoder: grid over Bx tiles, weights VMEM-resident (constant index map)
    gx = pl.pallas_call(
        _encode_x_kernel,
        out_shape=jax.ShapeDtypeStruct((Bx_pad, 8), f32),
        grid=(Bx_pad // TX,),
        in_specs=[
            pl.BlockSpec((TX, 8), lambda i: (i, 0)),
            full((8, 128)), full((1, 128)),
            full((128, 64)), full((1, 64)),
            full((64, 8)), full((1, 8)),
        ],
        out_specs=pl.BlockSpec((TX, 8), lambda i: (i, 0)),
        compiler_params=pltpu.CompilerParams(dimension_semantics=("parallel",)),
    )(x_pad, xw1_pad, params["xb1"], params["xw2"], params["xb2"],
      params["xw3"], params["xb3"])

    # ---- 2) v-encoder: grid over Bv tiles (first layer on the VPU)
    hv = pl.pallas_call(
        _encode_v_kernel,
        out_shape=jax.ShapeDtypeStruct((Bv_pad, 8), f32),
        grid=(Bv_pad // TV,),
        in_specs=[
            pl.BlockSpec((TV, 1), lambda j: (j, 0)),
            full((1, 128)), full((1, 128)),
            full((128, 64)), full((1, 64)),
            full((64, 8)), full((1, 8)),
        ],
        out_specs=pl.BlockSpec((TV, 8), lambda j: (j, 0)),
        compiler_params=pltpu.CompilerParams(dimension_semantics=("parallel",)),
    )(v_pad, params["vw1"], params["vb1"], params["vw2"], params["vb2"],
      params["vw3"], params["vb3"])

    # ---- 3) score matmul: grid over (Bx tiles, Bv tiles); lane-dense output tile
    scores_pad = pl.pallas_call(
        _score_kernel,
        out_shape=jax.ShapeDtypeStruct((Bx_pad, Bv_pad), f32),
        grid=(Bx_pad // TX, Bv_pad // TV),
        in_specs=[
            pl.BlockSpec((TX, 8), lambda i, j: (i, 0)),
            pl.BlockSpec((TV, 8), lambda i, j: (j, 0)),
        ],
        out_specs=pl.BlockSpec((TX, TV), lambda i, j: (i, j)),
        compiler_params=pltpu.CompilerParams(
            dimension_semantics=("parallel", "parallel")),
    )(gx, hv)

    return scores_pad[:Bx, :Bv]


# ------------------------------ params & reference --------------------------


def _linear_params(key, fan_in, fan_out):
    # Matches torch.nn.Linear default init: U(-1/sqrt(fan_in), 1/sqrt(fan_in)).
    kw, kb = jax.random.split(key)
    bound = 1.0 / float(fan_in) ** 0.5
    w = jax.random.uniform(kw, (fan_in, fan_out), jnp.float32, -bound, bound)
    b = jax.random.uniform(kb, (1, fan_out), jnp.float32, -bound, bound)
    return w, b


def init_params(key):
    keys = jax.random.split(key, 6)
    xw1, xb1 = _linear_params(keys[0], 7, 128)
    xw2, xb2 = _linear_params(keys[1], 128, 64)
    xw3, xb3 = _linear_params(keys[2], 64, 8)
    vw1, vb1 = _linear_params(keys[3], 1, 128)
    vw2, vb2 = _linear_params(keys[4], 128, 64)
    vw3, vb3 = _linear_params(keys[5], 64, 8)
    return dict(xw1=xw1, xb1=xb1, xw2=xw2, xb2=xb2, xw3=xw3, xb3=xb3,
                vw1=vw1, vb1=vb1, vw2=vw2, vb2=vb2, vw3=vw3, vb3=vb3)


def _reference(x0i, v1, p):
    def mlp(x, w1, b1, w2, b2, w3, b3):
        h = jnp.maximum(x @ w1 + b1, 0.0)
        h = jnp.maximum(h @ w2 + b2, 0.0)
        return h @ w3 + b3
    gx = mlp(x0i, p["xw1"], p["xb1"], p["xw2"], p["xb2"], p["xw3"], p["xb3"])
    hv = mlp(v1,  p["vw1"], p["vb1"], p["vw2"], p["vb2"], p["vw3"], p["vb3"])
    return gx @ hv.T


if __name__ == "__main__":
    key = jax.random.PRNGKey(0)
    k_params, k_x, k_v, k_x2, k_v2 = jax.random.split(key, 5)

    params = init_params(k_params)

    # Small shapes consistent with the module (xi_encoder: 7 features, v_encoder: 1).
    Bx, Bv = 8, 8
    x0i = jax.random.normal(k_x, (Bx, 7), dtype=jnp.float32)
    v1 = jax.random.normal(k_v, (Bv, 1), dtype=jnp.float32)

    scores = marginal_separable_critic(x0i, v1, params)
    jax.block_until_ready(scores)
    ref = _reference(x0i, v1, params)
    assert scores.shape == (Bx, Bv)
    assert jnp.allclose(scores, ref, atol=1e-4, rtol=1e-4)

    # Exercise the multi-tile / ragged-padding path of the gridded kernels.
    Bx2, Bv2 = 272, 200
    x2 = jax.random.normal(k_x2, (Bx2, 7), dtype=jnp.float32)
    v2 = jax.random.normal(k_v2, (Bv2, 1), dtype=jnp.float32)
    s2 = marginal_separable_critic(x2, v2, params)
    jax.block_until_ready(s2)
    r2 = _reference(x2, v2, params)
    assert s2.shape == (Bx2, Bv2)
    assert jnp.allclose(s2, r2, atol=1e-4, rtol=1e-4)

    print("KERNEL_OK")
</pallas_src>

<mosaic_0001>
module attributes {stable_mosaic.version = 11 : i64} {
  func.func @_encode_x_kernel(%arg0: i32, %arg1: memref<8x8xf32, #tpu.memory_space<vmem>>, %arg2: memref<8x128xf32, #tpu.memory_space<vmem>>, %arg3: memref<1x128xf32, #tpu.memory_space<vmem>>, %arg4: memref<128x64xf32, #tpu.memory_space<vmem>>, %arg5: memref<1x64xf32, #tpu.memory_space<vmem>>, %arg6: memref<64x8xf32, #tpu.memory_space<vmem>>, %arg7: memref<1x8xf32, #tpu.memory_space<vmem>>, %arg8: memref<8x8xf32, #tpu.memory_space<vmem>>) attributes {dimension_semantics = [#tpu.dimension_semantics<parallel>], iteration_bounds = array<i64: 1>, scalar_prefetch = 0 : i64, scratch_operands = 0 : i64, tpu.core_type = #tpu.core_type<tc>, window_params = [{transform_indices = @transform_0, window_bounds = array<i64: 8, 8>}, {pipeline_mode = #tpu.pipeline_mode<synchronous>, transform_indices = @transform_1, window_bounds = array<i64: 8, 128>}, {pipeline_mode = #tpu.pipeline_mode<synchronous>, transform_indices = @transform_2, window_bounds = array<i64: 1, 128>}, {pipeline_mode = #tpu.pipeline_mode<synchronous>, transform_indices = @transform_3, window_bounds = array<i64: 128, 64>}, {pipeline_mode = #tpu.pipeline_mode<synchronous>, transform_indices = @transform_4, window_bounds = array<i64: 1, 64>}, {pipeline_mode = #tpu.pipeline_mode<synchronous>, transform_indices = @transform_5, window_bounds = array<i64: 64, 8>}, {pipeline_mode = #tpu.pipeline_mode<synchronous>, transform_indices = @transform_6, window_bounds = array<i64: 1, 8>}, {transform_indices = @transform_7, window_bounds = array<i64: 8, 8>}]} {
    %c0 = arith.constant 0 : index
    %c0_0 = arith.constant 0 : index
    %0 = vector.load %arg1[%c0, %c0_0] : memref<8x8xf32, #tpu.memory_space<vmem>>, vector<8x8xf32>
    %c0_1 = arith.constant 0 : index
    %c0_2 = arith.constant 0 : index
    %1 = vector.load %arg2[%c0_1, %c0_2] : memref<8x128xf32, #tpu.memory_space<vmem>>, vector<8x128xf32>
    %cst = arith.constant dense<0.000000e+00> : vector<8x128xf32>
    %2 = tpu.matmul %0, %1, %cst {dimension_numbers = #tpu.dot_dimension_numbers<[1], [0], [0], [1], [0, 0, 1, 1], [], []>} : vector<8x8xf32>, vector<8x128xf32>, vector<8x128xf32> -> vector<8x128xf32>
    %c0_3 = arith.constant 0 : index
    %c0_4 = arith.constant 0 : index
    %3 = vector.load %arg3[%c0_3, %c0_4] : memref<1x128xf32, #tpu.memory_space<vmem>>, vector<1x128xf32>
    %4 = vector.broadcast %3 : vector<1x128xf32> to vector<8x128xf32>
    %5 = arith.addf %2, %4 : vector<8x128xf32>
    %cst_5 = arith.constant 0.000000e+00 : f32
    %6 = vector.broadcast %cst_5 : f32 to vector<8x128xf32>
    %7 = arith.maximumf %5, %6 : vector<8x128xf32>
    %c0_6 = arith.constant 0 : index
    %c0_7 = arith.constant 0 : index
    %8 = vector.load %arg4[%c0_6, %c0_7] : memref<128x64xf32, #tpu.memory_space<vmem>>, vector<128x64xf32>
    %cst_8 = arith.constant dense<0.000000e+00> : vector<8x64xf32>
    %9 = tpu.matmul %7, %8, %cst_8 {dimension_numbers = #tpu.dot_dimension_numbers<[1], [0], [0], [1], [0, 0, 1, 1], [], []>} : vector<8x128xf32>, vector<128x64xf32>, vector<8x64xf32> -> vector<8x64xf32>
    %c0_9 = arith.constant 0 : index
    %c0_10 = arith.constant 0 : index
    %10 = vector.load %arg5[%c0_9, %c0_10] : memref<1x64xf32, #tpu.memory_space<vmem>>, vector<1x64xf32>
    %11 = vector.broadcast %10 : vector<1x64xf32> to vector<8x64xf32>
    %12 = arith.addf %9, %11 : vector<8x64xf32>
    %cst_11 = arith.constant 0.000000e+00 : f32
    %13 = vector.broadcast %cst_11 : f32 to vector<8x64xf32>
    %14 = arith.maximumf %12, %13 : vector<8x64xf32>
    %c0_12 = arith.constant 0 : index
    %c0_13 = arith.constant 0 : index
    %15 = vector.load %arg6[%c0_12, %c0_13] : memref<64x8xf32, #tpu.memory_space<vmem>>, vector<64x8xf32>
    %cst_14 = arith.constant dense<0.000000e+00> : vector<8x8xf32>
    %16 = tpu.matmul %14, %15, %cst_14 {dimension_numbers = #tpu.dot_dimension_numbers<[1], [0], [0], [1], [0, 0, 1, 1], [], []>} : vector<8x64xf32>, vector<64x8xf32>, vector<8x8xf32> -> vector<8x8xf32>
    %c0_15 = arith.constant 0 : index
    %c0_16 = arith.constant 0 : index
    %17 = vector.load %arg7[%c0_15, %c0_16] : memref<1x8xf32, #tpu.memory_space<vmem>>, vector<1x8xf32>
    %18 = vector.broadcast %17 : vector<1x8xf32> to vector<8x8xf32>
    %19 = arith.addf %16, %18 : vector<8x8xf32>
    %c0_17 = arith.constant 0 : index
    %c0_18 = arith.constant 0 : index
    %20 = vector.load %arg8[%c0_17, %c0_18] : memref<8x8xf32, #tpu.memory_space<vmem>>, vector<8x8xf32>
    tpu.vector_store %arg8[%c0_17, %c0_18], %19 {strides = array<i32>} : memref<8x8xf32, #tpu.memory_space<vmem>>, vector<8x8xf32>,
    return
  }
  func.func @transform_0(%arg0: i32) -> (i32, i32) {
    %c0_i32 = arith.constant 0 : i32
    %c0_i32_0 = arith.constant 0 : i32
    return %arg0, %c0_i32 : i32, i32
  }
  func.func @transform_1(%arg0: i32) -> (i32, i32) {
    %c0_i32 = arith.constant 0 : i32
    %c0_i32_0 = arith.constant 0 : i32
    %c0_i32_1 = arith.constant 0 : i32
    return %c0_i32, %c0_i32_0 : i32, i32
  }
  func.func @transform_2(%arg0: i32) -> (i32, i32) {
    %c0_i32 = arith.constant 0 : i32
    %c0_i32_0 = arith.constant 0 : i32
    %c0_i32_1 = arith.constant 0 : i32
    return %c0_i32, %c0_i32_0 : i32, i32
  }
  func.func @transform_3(%arg0: i32) -> (i32, i32) {
    %c0_i32 = arith.constant 0 : i32
    %c0_i32_0 = arith.constant 0 : i32
    %c0_i32_1 = arith.constant 0 : i32
    return %c0_i32, %c0_i32_0 : i32, i32
  }
  func.func @transform_4(%arg0: i32) -> (i32, i32) {
    %c0_i32 = arith.constant 0 : i32
    %c0_i32_0 = arith.constant 0 : i32
    %c0_i32_1 = arith.constant 0 : i32
    return %c0_i32, %c0_i32_0 : i32, i32
  }
  func.func @transform_5(%arg0: i32) -> (i32, i32) {
    %c0_i32 = arith.constant 0 : i32
    %c0_i32_0 = arith.constant 0 : i32
    %c0_i32_1 = arith.constant 0 : i32
    return %c0_i32, %c0_i32_0 : i32, i32
  }
  func.func @transform_6(%arg0: i32) -> (i32, i32) {
    %c0_i32 = arith.constant 0 : i32
    %c0_i32_0 = arith.constant 0 : i32
    %c0_i32_1 = arith.constant 0 : i32
    return %c0_i32, %c0_i32_0 : i32, i32
  }
  func.func @transform_7(%arg0: i32) -> (i32, i32) {
    %c0_i32 = arith.constant 0 : i32
    %c0_i32_0 = arith.constant 0 : i32
    return %arg0, %c0_i32 : i32, i32
  }
}

</mosaic_0001>

<llo_original>
// kernel: tpu_custom_call.1
$region0: #{tpu_custom_call.1}
  #allocation0 [shape = 'u32[]', space=smem, size = 0x4, offset = 0x4, fixed_abs, tag = 'smem constant byte address 0x4 - core index']
  #allocation1 [shape = 'u32[144,128]{1,0:T(1,128)}', space=vmem, size = 0x12000, scoped, tag = 'internal scratch']
  %s0 = inlined_call_operand.vmem [shape: f32[8,8], index: 0, kind: input, shape index: {}]
  %s1 = inlined_call_operand.vmem [shape: f32[8,128], index: 1, kind: input, shape index: {}]
  %s2 = inlined_call_operand.vmem [shape: f32[1,128], index: 2, kind: input, shape index: {}]
  %s3 = inlined_call_operand.vmem [shape: f32[128,64], index: 3, kind: input, shape index: {}]
  %s4 = inlined_call_operand.vmem [shape: f32[1,64], index: 4, kind: input, shape index: {}]
  %s5 = inlined_call_operand.vmem [shape: f32[64,8], index: 5, kind: input, shape index: {}]
  %s6 = inlined_call_operand.vmem [shape: f32[1,8], index: 6, kind: input, shape index: {}]
  %s7 = inlined_call_operand.hbm [shape: f32[8,8], index: 7, kind: output, shape index: {}]
  %s8 = sld [smem:[#allocation0]]
  $region38: #{tpu_custom_call.1} parent=0
    _
  %s10 = ssub.s32 1, %s8
  %s11 = scalar_select 0, %s10, %s8
  $region1: #{tpu_custom_call.1} parent=0
    #allocation2 [shape = 'u8[4096]{0}', space=vmem, size = 0x1000, scoped, tag = 'output window, operand 0, single buffered']
    #allocation3 [shape = 's32[1]{0}', space=sflag, size = 0x4, scoped, tag = 'scoped memory for tpu_custom_call.1']
    %12 = vsyncpa [#allocation3], 0
    // Predicated region
    $region2: #{tpu_custom_call.1} parent=1 // pred_check
      _
    $region3: #{tpu_custom_call.1} parent=1 // pred_check_branch
      %14 = sbr.rel (0) target = $region5
    $region4: #{tpu_custom_call.1} parent=1 // pred_region
      _
    $region5: #{tpu_custom_call.1} parent=1 // pred_fallthru
      _
    // Predicated region
    $region6: #{tpu_custom_call.1} parent=1 // pred_check
      _
    $region7: #{tpu_custom_call.1} parent=1 // pred_check_branch
      %16 = sbr.rel (0) target = $region9
    $region8: #{tpu_custom_call.1} parent=1 // pred_region
      _
    $region9: #{tpu_custom_call.1} parent=1 // pred_fallthru
      _
    // Predicated region
    $region10: #{tpu_custom_call.1} parent=1 // pred_check
      _
    $region11: #{tpu_custom_call.1} parent=1 // pred_check_branch
      %18 = sbr.rel (0) target = $region13
    $region12: #{tpu_custom_call.1} parent=1 // pred_region
      _
    $region13: #{tpu_custom_call.1} parent=1 // pred_fallthru
      _
    // Predicated region
    $region14: #{tpu_custom_call.1} parent=1 // pred_check
      _
    $region15: #{tpu_custom_call.1} parent=1 // pred_check_branch
      %20 = sbr.rel (0) target = $region17
    $region16: #{tpu_custom_call.1} parent=1 // pred_region
      _
    $region17: #{tpu_custom_call.1} parent=1 // pred_fallthru
      _
    // Predicated region
    $region18: #{tpu_custom_call.1} parent=1 // pred_check
      _
    $region19: #{tpu_custom_call.1} parent=1 // pred_check_branch
      %22 = sbr.rel (0) target = $region21
    $region20: #{tpu_custom_call.1} parent=1 // pred_region
      _
    $region21: #{tpu_custom_call.1} parent=1 // pred_fallthru
      _
    // Predicated region
    $region22: #{tpu_custom_call.1} parent=1 // pred_check
      _
    $region23: #{tpu_custom_call.1} parent=1 // pred_check_branch
      %24 = sbr.rel (0) target = $region25
    $region24: #{tpu_custom_call.1} parent=1 // pred_region
      _
    $region25: #{tpu_custom_call.1} parent=1 // pred_fallthru
      _
    // Predicated region
    $region26: #{tpu_custom_call.1} parent=1 // pred_check
      _
    $region27: #{tpu_custom_call.1} parent=1 // pred_check_branch
      %26 = sbr.rel (0) target = $region29
    $region28: #{tpu_custom_call.1} parent=1 // pred_region
      _
    $region29: #{tpu_custom_call.1} parent=1 // pred_fallthru
      _
    %v27 = vld [vmem:[%s0] sm:$0xff]
    %v28 = vld [vmem:[%s1] sm:$0xff]
    %v29 = vld [vmem:[%s2] sm:$0x1]
    %v31 = vlaneseq
    %v32 = vshrl.u32 %v31, 7
    %v33 = vsub.s32 0, %v32
    %v34 = vrot.slane %v29, %v33
    %vm36 = vcmask 64512
    %v38 = vsel %vm36, %v27, 0
    %40 = vmatprep.subr.mxu0 0.0
    %41 = vmatpush1.msra.mxu0 %v28
    %42 = vmatprep.subr.mxu0 0.0
    %43 = vmatpush1.msra.mxu0 0.0
    %44 = vmatprep.subr.mxu0 0.0
    %45 = vmatpush1.msra.mxu0 0.0
    %46 = vmatprep.subr.mxu0 0.0
    %47 = vmatpush1.msra.mxu0 0.0
    %48 = vmatprep.subr.mxu0 0.0
    %49 = vmatpush1.msra.mxu0 0.0
    %50 = vmatprep.subr.mxu0 0.0
    %51 = vmatpush1.msra.mxu0 0.0
    %52 = vmatprep.subr.mxu0 0.0
    %53 = vmatpush1.msra.mxu0 0.0
    %54 = vmatprep.subr.mxu0 0.0
    %55 = vmatpush1.msra.mxu0 0.0
    %56 = vmatprep.subr.mxu0 0.0
    %57 = vmatpush1.msra.mxu0 0.0
    %58 = vmatprep.subr.mxu0 0.0
    %59 = vmatpush1.msra.mxu0 0.0
    %60 = vmatprep.subr.mxu0 0.0
    %61 = vmatpush1.msra.mxu0 0.0
    %62 = vmatprep.subr.mxu0 0.0
    %63 = vmatpush1.msra.mxu0 0.0
    %64 = vmatprep.subr.mxu0 0.0
    %65 = vmatpush1.msra.mxu0 0.0
    %66 = vmatprep.subr.mxu0 0.0
    %67 = vmatpush1.msra.mxu0 0.0
    %68 = vmatprep.subr.mxu0 0.0
    %69 = vmatpush1.msra.mxu0 0.0
    %70 = vmatprep.subr.mxu0 0.0
    %71 = vmatpush1.msra.mxu0 0.0
    %72 = vmatprep.subr.mxu0 0.0
    %73 = vmatpush1.msra.mxu0 0.0
    %74 = vmatprep.subr.mxu0 0.0
    %75 = vmatpush1.msra.mxu0 0.0
    %76 = vmatprep.subr.mxu0 0.0
    %77 = vmatpush1.msra.mxu0 0.0
    %78 = vmatprep.subr.mxu0 0.0
    %79 = vmatpush1.msra.mxu0 0.0
    %80 = vmatprep.subr.mxu0 0.0
    %81 = vmatpush1.msra.mxu0 0.0
    %82 = vmatprep.subr.mxu0 0.0
    %83 = vmatpush1.msra.mxu0 0.0
    %84 = vmatprep.subr.mxu0 0.0
    %85 = vmatpush1.msra.mxu0 0.0
    %86 = vmatprep.subr.mxu0 0.0
    %87 = vmatpush1.msra.mxu0 0.0
    %88 = vmatprep.subr.mxu0 0.0
    %89 = vmatpush1.msra.mxu0 0.0
    %90 = vmatprep.subr.mxu0 0.0
    %91 = vmatpush1.msra.mxu0 0.0
    %92 = vmatprep.subr.mxu0 0.0
    %93 = vmatpush1.msra.mxu0 0.0
    %94 = vmatprep.subr.mxu0 0.0
    %95 = vmatpush1.msra.mxu0 0.0
    %96 = vmatprep.subr.mxu0 0.0
    %97 = vmatpush1.msra.mxu0 0.0
    %98 = vmatprep.subr.mxu0 0.0
    %99 = vmatpush1.msra.mxu0 0.0
    %100 = vmatprep.subr.mxu0 0.0
    %101 = vmatpush1.msra.mxu0 0.0
    %102 = vmatprep.subr.mxu0 0.0
    %103 = vmatpush1.msra.mxu0 0.0
    %104 = vmatprep.mubr.f32.mxu0 0.0
    %105 = vmatmul.mubr.f32.gmra.mrb[0].mxu0 %v38
    %v106 = vpop.f32.mrb[0].mxu0
    %v107 = vadd.f32 %v34, %v106
    %v108 = vpop.f32.mrb[0].mxu0
    %109 = vdwg.mxu0
    %v110 = vmax.f32 %v107, 0.0
    %v111 = vld [vmem:[%s3] sm:$0xff]
    %v112 = vld [vmem:[%s3 + $0x8] sm:$0xff]
    %v113 = vld [vmem:[%s3 + $0x10] sm:$0xff]
    %v114 = vld [vmem:[%s3 + $0x18] sm:$0xff]
    %v115 = vld [vmem:[%s3 + $0x20] sm:$0xff]
    %v116 = vld [vmem:[%s3 + $0x28] sm:$0xff]
    %v117 = vld [vmem:[%s3 + $0x30] sm:$0xff]
    %v118 = vld [vmem:[%s3 + $0x38] sm:$0xff]
    %v119 = vld [vmem:[%s3 + $0x40] sm:$0xff]
    %v120 = vld [vmem:[%s3 + $0x48] sm:$0xff]
    %v121 = vld [vmem:[%s3 + $0x50] sm:$0xff]
    %v122 = vld [vmem:[%s3 + $0x58] sm:$0xff]
    %v123 = vld [vmem:[%s3 + $0x60] sm:$0xff]
    %v124 = vld [vmem:[%s3 + $0x68] sm:$0xff]
    %v125 = vld [vmem:[%s3 + $0x70] sm:$0xff]
    %v126 = vld [vmem:[%s3 + $0x78] sm:$0xff]
    %v127 = vld [vmem:[%s4] sm:$0x1]
    %v129 = vlaneseq
    %v130 = vshrl.u32 %v129, 7
    %v131 = vsub.s32 0, %v130
    %v132 = vrot.slane %v127, %v131
    %134 = vmatprep.subr.mxu0 0.0
    %135 = vmatpush1.msra.mxu0 %v111
    %136 = vmatprep.subr.mxu0 0.0
    %137 = vmatpush1.msra.mxu0 %v112
    %138 = vmatprep.subr.mxu0 0.0
    %139 = vmatpush1.msra.mxu0 %v113
    %140 = vmatprep.subr.mxu0 0.0
    %141 = vmatpush1.msra.mxu0 %v114
    %142 = vmatprep.subr.mxu0 0.0
    %143 = vmatpush1.msra.mxu0 %v115
    %144 = vmatprep.subr.mxu0 0.0
    %145 = vmatpush1.msra.mxu0 %v116
    %146 = vmatprep.subr.mxu0 0.0
    %147 = vmatpush1.msra.mxu0 %v117
    %148 = vmatprep.subr.mxu0 0.0
    %149 = vmatpush1.msra.mxu0 %v118
    %150 = vmatprep.subr.mxu0 0.0
    %151 = vmatpush1.msra.mxu0 %v119
    %152 = vmatprep.subr.mxu0 0.0
    %153 = vmatpush1.msra.mxu0 %v120
    %154 = vmatprep.subr.mxu0 0.0
    %155 = vmatpush1.msra.mxu0 %v121
    %156 = vmatprep.subr.mxu0 0.0
    %157 = vmatpush1.msra.mxu0 %v122
    %158 = vmatprep.subr.mxu0 0.0
    %159 = vmatpush1.msra.mxu0 %v123
    %160 = vmatprep.subr.mxu0 0.0
    %161 = vmatpush1.msra.mxu0 %v124
    %162 = vmatprep.subr.mxu0 0.0
    %163 = vmatpush1.msra.mxu0 %v125
    %164 = vmatprep.subr.mxu0 0.0
    %165 = vmatpush1.msra.mxu0 %v126
    %166 = vmatprep.subr.mxu0 0.0
    %167 = vmatpush1.msra.mxu0 0.0
    %168 = vmatprep.subr.mxu0 0.0
    %169 = vmatpush1.msra.mxu0 0.0
    %170 = vmatprep.subr.mxu0 0.0
    %171 = vmatpush1.msra.mxu0 0.0
    %172 = vmatprep.subr.mxu0 0.0
    %173 = vmatpush1.msra.mxu0 0.0
    %174 = vmatprep.subr.mxu0 0.0
    %175 = vmatpush1.msra.mxu0 0.0
    %176 = vmatprep.subr.mxu0 0.0
    %177 = vmatpush1.msra.mxu0 0.0
    %178 = vmatprep.subr.mxu0 0.0
    %179 = vmatpush1.msra.mxu0 0.0
    %180 = vmatprep.subr.mxu0 0.0
    %181 = vmatpush1.msra.mxu0 0.0
    %182 = vmatprep.subr.mxu0 0.0
    %183 = vmatpush1.msra.mxu0 0.0
    %184 = vmatprep.subr.mxu0 0.0
    %185 = vmatpush1.msra.mxu0 0.0
    %186 = vmatprep.subr.mxu0 0.0
    %187 = vmatpush1.msra.mxu0 0.0
    %188 = vmatprep.subr.mxu0 0.0
    %189 = vmatpush1.msra.mxu0 0.0
    %190 = vmatprep.subr.mxu0 0.0
    %191 = vmatpush1.msra.mxu0 0.0
    %192 = vmatprep.subr.mxu0 0.0
    %193 = vmatpush1.msra.mxu0 0.0
    %194 = vmatprep.subr.mxu0 0.0
    %195 = vmatpush1.msra.mxu0 0.0
    %196 = vmatprep.subr.mxu0 0.0
    %197 = vmatpush1.msra.mxu0 0.0
    %198 = vmatprep.mubr.f32.mxu0 0.0
    %199 = vmatmul.mubr.f32.gmra.mrb[0].mxu0 %v110
    %v200 = vpop.f32.mrb[0].mxu0
    %v201 = vadd.f32 %v132, %v200
    %v202 = vpop.f32.mrb[0].mxu0
    %203 = vdwg.mxu0
    %v204 = vmax.f32 %v201, 0.0
    %v205 = vld [vmem:[%s5] sm:$0xff]
    %v206 = vld [vmem:[%s5 + $0x8] sm:$0xff]
    %v207 = vld [vmem:[%s5 + $0x10] sm:$0xff]
    %v208 = vld [vmem:[%s5 + $0x18] sm:$0xff]
    %v209 = vld [vmem:[%s5 + $0x20] sm:$0xff]
    %v210 = vld [vmem:[%s5 + $0x28] sm:$0xff]
    %v211 = vld [vmem:[%s5 + $0x30] sm:$0xff]
    %v212 = vld [vmem:[%s5 + $0x38] sm:$0xff]
    %v213 = vld [vmem:[%s6] sm:$0x1]
    %v215 = vlaneseq
    %v216 = vshrl.u32 %v215, 7
    %v217 = vsub.s32 0, %v216
    %v218 = vrot.slane %v213, %v217
    %vm220 = vcmask 523264
    %v222 = vsel %vm220, %v204, 0
    %224 = vmatprep.subr.mxu0 0.0
    %225 = vmatpush1.msra.mxu0 %v205
    %226 = vmatprep.subr.mxu0 0.0
    %227 = vmatpush1.msra.mxu0 %v206
    %228 = vmatprep.subr.mxu0 0.0
    %229 = vmatpush1.msra.mxu0 %v207
    %230 = vmatprep.subr.mxu0 0.0
    %231 = vmatpush1.msra.mxu0 %v208
    %232 = vmatprep.subr.mxu0 0.0
    %233 = vmatpush1.msra.mxu0 %v209
    %234 = vmatprep.subr.mxu0 0.0
    %235 = vmatpush1.msra.mxu0 %v210
    %236 = vmatprep.subr.mxu0 0.0
    %237 = vmatpush1.msra.mxu0 %v211
    %238 = vmatprep.subr.mxu0 0.0
    %239 = vmatpush1.msra.mxu0 %v212
    %240 = vmatprep.subr.mxu0 0.0
    %241 = vmatpush1.msra.mxu0 0.0
    %242 = vmatprep.subr.mxu0 0.0
    %243 = vmatpush1.msra.mxu0 0.0
    %244 = vmatprep.subr.mxu0 0.0
    %245 = vmatpush1.msra.mxu0 0.0
    %246 = vmatprep.subr.mxu0 0.0
    %247 = vmatpush1.msra.mxu0 0.0
    %248 = vmatprep.subr.mxu0 0.0
    %249 = vmatpush1.msra.mxu0 0.0
    %250 = vmatprep.subr.mxu0 0.0
    %251 = vmatpush1.msra.mxu0 0.0
    %252 = vmatprep.subr.mxu0 0.0
    %253 = vmatpush1.msra.mxu0 0.0
    %254 = vmatprep.subr.mxu0 0.0
    %255 = vmatpush1.msra.mxu0 0.0
    %256 = vmatprep.subr.mxu0 0.0
    %257 = vmatpush1.msra.mxu0 0.0
    %258 = vmatprep.subr.mxu0 0.0
    %259 = vmatpush1.msra.mxu0 0.0
    %260 = vmatprep.subr.mxu0 0.0
    %261 = vmatpush1.msra.mxu0 0.0
    %262 = vmatprep.subr.mxu0 0.0
    %263 = vmatpush1.msra.mxu0 0.0
    %264 = vmatprep.subr.mxu0 0.0
    %265 = vmatpush1.msra.mxu0 0.0
    %266 = vmatprep.subr.mxu0 0.0
    %267 = vmatpush1.msra.mxu0 0.0
    %268 = vmatprep.subr.mxu0 0.0
    %269 = vmatpush1.msra.mxu0 0.0
    %270 = vmatprep.subr.mxu0 0.0
    %271 = vmatpush1.msra.mxu0 0.0
    %272 = vmatprep.subr.mxu0 0.0
    %273 = vmatpush1.msra.mxu0 0.0
    %274 = vmatprep.subr.mxu0 0.0
    %275 = vmatpush1.msra.mxu0 0.0
    %276 = vmatprep.subr.mxu0 0.0
    %277 = vmatpush1.msra.mxu0 0.0
    %278 = vmatprep.subr.mxu0 0.0
    %279 = vmatpush1.msra.mxu0 0.0
    %280 = vmatprep.subr.mxu0 0.0
    %281 = vmatpush1.msra.mxu0 0.0
    %282 = vmatprep.subr.mxu0 0.0
    %283 = vmatpush1.msra.mxu0 0.0
    %284 = vmatprep.subr.mxu0 0.0
    %285 = vmatpush1.msra.mxu0 0.0
    %286 = vmatprep.subr.mxu0 0.0
    %287 = vmatpush1.msra.mxu0 0.0
    %288 = vmatprep.mubr.f32.mxu0 0.0
    %289 = vmatmul.mubr.f32.gmra.mrb[0].mxu0 %v222
    %v290 = vpop.f32.mrb[0].mxu0
    %v291 = vadd.f32 %v218, %v290
    %v292 = vpop.f32.mrb[0].mxu0
    %293 = vdwg.mxu0
    %294 = vst.msk [vmem:[#allocation2] sm:$0xff] %vm36, %v291
    // Predicated region
    $region30: #{tpu_custom_call.1} parent=1 // pred_check
      _
    $region31: #{tpu_custom_call.1} parent=1 // pred_check_branch
      %296 = sbr.rel (0) target = $region33
    $region32: #{tpu_custom_call.1} parent=1 // pred_region
      %s298 = ssub.s32 128, 128
      %299 = vsyncadd [#allocation3], %s298
      %s301 = sshll.u32 [#allocation2], 4
      %s302 = int_to_ptr.vmem [resolvable:$true] %s301
      %304 = dma.vmem_to_hbm [thread:$0]  %s302, 128, %s7, [#allocation3]
    $region33: #{tpu_custom_call.1} parent=1 // pred_fallthru
      _
    // Predicated region
    $region34: #{tpu_custom_call.1} parent=1 // pred_check
      _
    $region35: #{tpu_custom_call.1} parent=1 // pred_check_branch
      %306 = sbr.rel (0) target = $region37
    $region36: #{tpu_custom_call.1} parent=1 // pred_region
      %307 = dma.done [#allocation3], 128
    $region37: #{tpu_custom_call.1} parent=1 // pred_fallthru
      _
    %308 = vsyncpa [#allocation3], 1

</llo_original>
